<compile_context>
chip_gen: v7x
topology: tpu7x:2x2x1
jax: 0.10.0
libtpu: 0.0.40
codegen_flags: <defaults>
</compile_context>

<pallas_src>
import functools

import jax
import jax.numpy as jnp
from jax import lax
from jax.experimental import pallas as pl
from jax.experimental.pallas import tpu as pltpu


# Where each tap of the (1,K) directional weights lands in the 3x3 kernel
# (row-major 3x3 positions; None = zero), exactly as built in the PyTorch forward.
_PATTERNS = {
    "hv":  (None, 0, None, 1, 2, 3, None, 4, None),
    "d":   (0, None, 1, None, 2, None, 3, None, 4),
    "135": (0, 1, None, 2, None, 3, None, 4, 5),
    "45":  (None, 0, 1, 2, None, 3, 4, 5, None),
}

_OFFSETS = tuple((dy, dx) for dy in (-1, 0, 1) for dx in (-1, 0, 1))


def _conv2d_cross_kernel(x_ref, mask_ref, w_ref, b_ref, out_ref, patches_ref,
                         *, cin, W, nblk):
    # One grid step = Bblk images concatenated on the lane axis.
    #   x_ref:       (cin, nblk)      C on sublanes, Bblk*H*W pixels on lanes
    #   mask_ref:    (9, nblk)        per-tap SAME-padding validity masks
    #   w_ref:       (Cout, 9*cin)    directional 3x3 taps with -theta*diff at the
    #                                 centre AND the 1x1 out_conv folded in
    #   b_ref:       (Cout, 1)        out_conv bias
    #   out_ref:     (Cout, nblk)
    #   patches_ref: (9*cin, nblk)    im2col VMEM scratch
    x = x_ref[...]
    for t, (dy, dx) in enumerate(_OFFSETS):
        shift = dy * W + dx
        if shift == 0:
            shifted = x
        else:
            # want shifted[p] = x[p + shift]; circular wrap-around (including
            # across image boundaries within the block) only lands on positions
            # the validity mask zeroes, so an XLU lane rotate is exact.
            shifted = pltpu.roll(x, (-shift) % nblk, axis=1)
        patches_ref[t * cin:(t + 1) * cin, :] = shifted * mask_ref[t:t + 1, :]

    # Single MXU matmul: all 4 directional branches + the 1x1 out_conv at once.
    # Operands kept f32 (bf16 cast would exceed the 1e-4 reference tolerance).
    out = jnp.dot(w_ref[...], patches_ref[...], preferred_element_type=jnp.float32)
    out_ref[...] = (out + b_ref[...]).astype(out_ref.dtype)


def _branch_taps(w, pattern, theta):
    """w: (Cout, Cin, K) taps of a (1,K) conv -> (Cout, 9, Cin) effective 3x3 taps
    with the '- theta * kernel_diff' 1x1 conv folded into the centre tap."""
    Cout, Cin, _ = w.shape
    zero = jnp.zeros((Cout, Cin), w.dtype)
    diff = jnp.sum(w, axis=-1)                      # kernel_diff: (Cout, Cin)
    taps = []
    for t, p in enumerate(pattern):
        tap = zero if p is None else w[:, :, p]
        if t == 4:                                  # centre of the 3x3 kernel
            tap = tap - theta * diff
        taps.append(tap)
    return jnp.stack(taps, axis=1)                  # (Cout, 9, Cin)


def _choose_bblk(B, HW, cin_p, cout, *, target_lanes=512, vmem_budget=12 << 20):
    """Largest divisor of B whose block fits the VMEM budget (sized for v7x's
    64 MiB VMEM), keeping >= 2 parallel grid steps when B >= 2 (megacore), and
    stopping once the lane width is fat enough to amortize per-step overhead."""
    best = 1
    for cand in range(1, B + 1):
        if B % cand:
            continue
        steps = B // cand
        if B >= 2 and steps < 2:
            continue                                # keep both v7x TCs busy
        nblk = cand * HW
        vmem = 4 * (2 * cin_p * nblk                # double-buffered x block
                    + 9 * cin_p * nblk              # im2col scratch
                    + 2 * cout * nblk               # double-buffered out block
                    + 2 * 9 * nblk)                 # masks
        if vmem > vmem_budget:
            break
        best = cand
        if nblk >= target_lanes:
            break
    return best


def conv2d_cross_pallas(x_nchw, params, theta=0.7):
    """x_nchw: (B, Cin, H, W) f32.  params: PyTorch-shaped weights (see __main__)."""
    B, Cin, H, W = x_nchw.shape
    Cout = params["w_hv"].shape[0]
    HW = H * W
    # TODO(synk): pad the lane axis for H*W not a multiple of 128 (not needed here).
    assert HW % 128 == 0, "H*W must be lane-aligned (multiple of 128)"
    Cin_p = ((Cin + 7) // 8) * 8                    # sublane-align channels

    # ---- fold the on-the-fly 3x3 construction, -theta*kernel_diff, AND the 1x1
    #      out_conv into ONE (Cout, 9*Cin_p) matrix (feedback item 1). ----
    taps = jnp.stack([
        _branch_taps(params["w_hv"][:, :, 0, :],  _PATTERNS["hv"],  theta),
        _branch_taps(params["w_d"][:, :, 0, :],   _PATTERNS["d"],   theta),
        _branch_taps(params["w_135"][:, :, 0, :], _PATTERNS["135"], theta),
        _branch_taps(params["w_45"][:, :, 0, :],  _PATTERNS["45"],  theta),
    ], axis=0)                                      # (4, Cout, 9, Cin)
    taps = jnp.pad(taps, ((0, 0), (0, 0), (0, 0), (0, Cin_p - Cin)))
    wb = taps.reshape(4 * Cout, 9 * Cin_p).astype(jnp.float32)
    wo = params["w_out"][:, :, 0, 0].astype(jnp.float32)       # (Cout, 4*Cout)
    # HIGHEST so the trace-time fold itself doesn't drop to bf16 matmul precision.
    w_fused = jnp.dot(wo, wb, precision=lax.Precision.HIGHEST)  # (Cout, 9*Cin_p)
    b = params["b_out"].reshape(Cout, 1).astype(jnp.float32)

    # ---- batch blocking (feedback item 2) ----
    Bblk = _choose_bblk(B, HW, Cin_p, Cout)
    nsteps = B // Bblk
    Nblk = Bblk * HW

    # ---- SAME-padding validity masks for the 9 taps, tiled over the Bblk images ----
    hh = jnp.repeat(jnp.arange(H), W)
    ww = jnp.tile(jnp.arange(W), H)
    rows = [((hh + dy >= 0) & (hh + dy < H) & (ww + dx >= 0) & (ww + dx < W))
            for dy, dx in _OFFSETS]
    masks = jnp.tile(jnp.stack(rows, 0).astype(jnp.float32), (1, Bblk))  # (9, Nblk)

    # ---- lane-dense layout: channels on sublanes, batch*pixels on lanes ----
    x_f = x_nchw.reshape(B, Cin, HW).transpose(1, 0, 2)        # (Cin, B, HW)
    x_f = jnp.pad(x_f, ((0, Cin_p - Cin), (0, 0), (0, 0)))
    x_f = x_f.reshape(Cin_p, B * HW).astype(jnp.float32)

    kernel = functools.partial(_conv2d_cross_kernel, cin=Cin_p, W=W, nblk=Nblk)

    # Explicit VMEM limit (feedback: size blocks for v7x's 64 MiB VMEM).
    vmem_est = 4 * (2 * Cin_p * Nblk + 9 * Cin_p * Nblk + 2 * Cout * Nblk
                    + 2 * 9 * Nblk + Cout * 9 * Cin_p + Cout)
    vmem_limit = int(min(max(4 * vmem_est, 16 << 20), 32 << 20))

    out_flat = pl.pallas_call(
        kernel,
        out_shape=jax.ShapeDtypeStruct((Cout, B * HW), x_nchw.dtype),
        grid_spec=pltpu.PrefetchScalarGridSpec(
            num_scalar_prefetch=0,
            grid=(nsteps,),
            in_specs=[
                pl.BlockSpec((Cin_p, Nblk), lambda i: (0, i)),
                pl.BlockSpec((9, Nblk), lambda i: (0, 0)),
                pl.BlockSpec((Cout, 9 * Cin_p), lambda i: (0, 0)),
                pl.BlockSpec((Cout, 1), lambda i: (0, 0)),
            ],
            out_specs=pl.BlockSpec((Cout, Nblk), lambda i: (0, i)),
            scratch_shapes=[pltpu.VMEM((9 * Cin_p, Nblk), jnp.float32)],
        ),
        compiler_params=pltpu.CompilerParams(
            dimension_semantics=("parallel",),
            vmem_limit_bytes=vmem_limit),
    )(x_f, masks, w_fused, b)

    out = out_flat.reshape(Cout, B, HW).transpose(1, 0, 2)     # (B, Cout, HW)
    return out.reshape(B, Cout, H, W)


def conv2d_cross_reference(x, params, theta=0.7):
    """Pure-JAX NCHW reference matching the PyTorch module step by step."""
    dn = ("NCHW", "OIHW", "NCHW")
    prec = jax.lax.Precision.HIGHEST

    def conv(v, w, padding):
        return lax.conv_general_dilated(v, w, (1, 1), padding,
                                        dimension_numbers=dn, precision=prec)

    Cout, Cin = params["w_hv"].shape[:2]
    zeros = jnp.zeros((Cout, Cin, 1), x.dtype)

    def branch(w, pattern):
        cols = [zeros if p is None else w[:, :, :, p] for p in pattern]
        w3 = jnp.concatenate(cols, axis=2).reshape(Cout, Cin, 3, 3)
        out_normal = conv(x, w3, [(1, 1), (1, 1)])
        kd = jnp.sum(w, axis=(2, 3))[:, :, None, None]
        out_diff = conv(x, kd, [(0, 0), (0, 0)])
        return out_normal - theta * out_diff

    outs = [branch(params["w_hv"], _PATTERNS["hv"]),
            branch(params["w_d"], _PATTERNS["d"]),
            branch(params["w_135"], _PATTERNS["135"]),
            branch(params["w_45"], _PATTERNS["45"])]
    out_all = jnp.concatenate(outs, axis=1)
    out = conv(out_all, params["w_out"], [(0, 0), (0, 0)])
    return out + params["b_out"][None, :, None, None]


if __name__ == "__main__":
    # Small shapes consistent with the module: in=out channels 4, 16x16 spatial,
    # batch 2, theta=0.7.  Directional convs have no bias; out_conv has bias.
    B, Cin, Cout, H, W = 2, 4, 4, 16, 16
    theta = 0.7

    key = jax.random.PRNGKey(0)
    ks = jax.random.split(key, 7)
    params = {
        "w_hv":  0.1 * jax.random.normal(ks[0], (Cout, Cin, 1, 5), jnp.float32),
        "w_d":   0.1 * jax.random.normal(ks[1], (Cout, Cin, 1, 5), jnp.float32),
        "w_135": 0.1 * jax.random.normal(ks[2], (Cout, Cin, 1, 6), jnp.float32),
        "w_45":  0.1 * jax.random.normal(ks[3], (Cout, Cin, 1, 6), jnp.float32),
        "w_out": 0.1 * jax.random.normal(ks[4], (Cout, 4 * Cout, 1, 1), jnp.float32),
        "b_out": 0.1 * jax.random.normal(ks[5], (Cout,), jnp.float32),
    }
    x = jax.random.normal(ks[6], (B, Cin, H, W), jnp.float32)

    out = conv2d_cross_pallas(x, params, theta=theta)
    out = jax.block_until_ready(out)

    ref = conv2d_cross_reference(x, params, theta=theta)
    assert out.shape == (B, Cout, H, W)
    max_err = float(jnp.max(jnp.abs(out - ref)))
    assert jnp.allclose(out, ref, atol=1e-4, rtol=1e-4), max_err
    print("KERNEL_OK")
</pallas_src>

<mosaic_0001>
module attributes {stable_mosaic.version = 11 : i64} {
  func.func @_conv2d_cross_kernel(%arg0: i32, %arg1: memref<8x256xf32, #tpu.memory_space<vmem>>, %arg2: memref<9x256xf32, #tpu.memory_space<vmem>>, %arg3: memref<4x72xf32, #tpu.memory_space<vmem>>, %arg4: memref<4x1xf32, #tpu.memory_space<vmem>>, %arg5: memref<4x256xf32, #tpu.memory_space<vmem>>, %arg6: memref<72x256xf32, #tpu.memory_space<vmem>>) attributes {dimension_semantics = [#tpu.dimension_semantics<parallel>], iteration_bounds = array<i64: 2>, scalar_prefetch = 0 : i64, scratch_operands = 1 : i64, tpu.core_type = #tpu.core_type<tc>, window_params = [{transform_indices = @transform_0, window_bounds = array<i64: 8, 256>}, {pipeline_mode = #tpu.pipeline_mode<synchronous>, transform_indices = @transform_1, window_bounds = array<i64: 9, 256>}, {pipeline_mode = #tpu.pipeline_mode<synchronous>, transform_indices = @transform_2, window_bounds = array<i64: 4, 72>}, {pipeline_mode = #tpu.pipeline_mode<synchronous>, transform_indices = @transform_3, window_bounds = array<i64: 4, 1>}, {transform_indices = @transform_4, window_bounds = array<i64: 4, 256>}]} {
    %c0 = arith.constant 0 : index
    %c0_0 = arith.constant 0 : index
    %0 = vector.load %arg1[%c0, %c0_0] : memref<8x256xf32, #tpu.memory_space<vmem>>, vector<8x256xf32>
    %c17_i32 = arith.constant 17 : i32
    %1 = tpu.dynamic_rotate %0 by %c17_i32 dim 1 : vector<8x256xf32>, i32 -> vector<8x256xf32>
    %c0_1 = arith.constant 0 : index
    %c0_2 = arith.constant 0 : index
    %2 = vector.load %arg2[%c0_1, %c0_2] : memref<9x256xf32, #tpu.memory_space<vmem>>, vector<1x256xf32>
    %3 = vector.broadcast %2 : vector<1x256xf32> to vector<8x256xf32>
    %4 = arith.mulf %1, %3 : vector<8x256xf32>
    %c0_3 = arith.constant 0 : index
    %c0_4 = arith.constant 0 : index
    %5 = vector.load %arg6[%c0_3, %c0_4] : memref<72x256xf32, #tpu.memory_space<vmem>>, vector<8x256xf32>
    tpu.vector_store %arg6[%c0_3, %c0_4], %4 {strides = array<i32>} : memref<72x256xf32, #tpu.memory_space<vmem>>, vector<8x256xf32>,
    %c16_i32 = arith.constant 16 : i32
    %6 = tpu.dynamic_rotate %0 by %c16_i32 dim 1 : vector<8x256xf32>, i32 -> vector<8x256xf32>
    %c1 = arith.constant 1 : index
    %c0_5 = arith.constant 0 : index
    %7 = vector.load %arg2[%c1, %c0_5] : memref<9x256xf32, #tpu.memory_space<vmem>>, vector<1x256xf32>
    %8 = vector.broadcast %7 : vector<1x256xf32> to vector<8x256xf32>
    %9 = arith.mulf %6, %8 : vector<8x256xf32>
    %c8 = arith.constant 8 : index
    %c0_6 = arith.constant 0 : index
    %10 = vector.load %arg6[%c8, %c0_6] : memref<72x256xf32, #tpu.memory_space<vmem>>, vector<8x256xf32>
    tpu.vector_store %arg6[%c8, %c0_6], %9 {strides = array<i32>} : memref<72x256xf32, #tpu.memory_space<vmem>>, vector<8x256xf32>,
    %c15_i32 = arith.constant 15 : i32
    %11 = tpu.dynamic_rotate %0 by %c15_i32 dim 1 : vector<8x256xf32>, i32 -> vector<8x256xf32>
    %c2 = arith.constant 2 : index
    %c0_7 = arith.constant 0 : index
    %12 = vector.load %arg2[%c2, %c0_7] : memref<9x256xf32, #tpu.memory_space<vmem>>, vector<1x256xf32>
    %13 = vector.broadcast %12 : vector<1x256xf32> to vector<8x256xf32>
    %14 = arith.mulf %11, %13 : vector<8x256xf32>
    %c16 = arith.constant 16 : index
    %c0_8 = arith.constant 0 : index
    %15 = vector.load %arg6[%c16, %c0_8] : memref<72x256xf32, #tpu.memory_space<vmem>>, vector<8x256xf32>
    tpu.vector_store %arg6[%c16, %c0_8], %14 {strides = array<i32>} : memref<72x256xf32, #tpu.memory_space<vmem>>, vector<8x256xf32>,
    %c1_i32 = arith.constant 1 : i32
    %16 = tpu.dynamic_rotate %0 by %c1_i32 dim 1 : vector<8x256xf32>, i32 -> vector<8x256xf32>
    %c3 = arith.constant 3 : index
    %c0_9 = arith.constant 0 : index
    %17 = vector.load %arg2[%c3, %c0_9] : memref<9x256xf32, #tpu.memory_space<vmem>>, vector<1x256xf32>
    %18 = vector.broadcast %17 : vector<1x256xf32> to vector<8x256xf32>
    %19 = arith.mulf %16, %18 : vector<8x256xf32>
    %c24 = arith.constant 24 : index
    %c0_10 = arith.constant 0 : index
    %20 = vector.load %arg6[%c24, %c0_10] : memref<72x256xf32, #tpu.memory_space<vmem>>, vector<8x256xf32>
    tpu.vector_store %arg6[%c24, %c0_10], %19 {strides = array<i32>} : memref<72x256xf32, #tpu.memory_space<vmem>>, vector<8x256xf32>,
    %c4 = arith.constant 4 : index
    %c0_11 = arith.constant 0 : index
    %21 = vector.load %arg2[%c4, %c0_11] : memref<9x256xf32, #tpu.memory_space<vmem>>, vector<1x256xf32>
    %22 = vector.broadcast %21 : vector<1x256xf32> to vector<8x256xf32>
    %23 = arith.mulf %0, %22 : vector<8x256xf32>
    %c32 = arith.constant 32 : index
    %c0_12 = arith.constant 0 : index
    %24 = vector.load %arg6[%c32, %c0_12] : memref<72x256xf32, #tpu.memory_space<vmem>>, vector<8x256xf32>
    tpu.vector_store %arg6[%c32, %c0_12], %23 {strides = array<i32>} : memref<72x256xf32, #tpu.memory_space<vmem>>, vector<8x256xf32>,
    %c255_i32 = arith.constant 255 : i32
    %25 = tpu.dynamic_rotate %0 by %c255_i32 dim 1 : vector<8x256xf32>, i32 -> vector<8x256xf32>
    %c5 = arith.constant 5 : index
    %c0_13 = arith.constant 0 : index
    %26 = vector.load %arg2[%c5, %c0_13] : memref<9x256xf32, #tpu.memory_space<vmem>>, vector<1x256xf32>
    %27 = vector.broadcast %26 : vector<1x256xf32> to vector<8x256xf32>
    %28 = arith.mulf %25, %27 : vector<8x256xf32>
    %c40 = arith.constant 40 : index
    %c0_14 = arith.constant 0 : index
    %29 = vector.load %arg6[%c40, %c0_14] : memref<72x256xf32, #tpu.memory_space<vmem>>, vector<8x256xf32>
    tpu.vector_store %arg6[%c40, %c0_14], %28 {strides = array<i32>} : memref<72x256xf32, #tpu.memory_space<vmem>>, vector<8x256xf32>,
    %c241_i32 = arith.constant 241 : i32
    %30 = tpu.dynamic_rotate %0 by %c241_i32 dim 1 : vector<8x256xf32>, i32 -> vector<8x256xf32>
    %c6 = arith.constant 6 : index
    %c0_15 = arith.constant 0 : index
    %31 = vector.load %arg2[%c6, %c0_15] : memref<9x256xf32, #tpu.memory_space<vmem>>, vector<1x256xf32>
    %32 = vector.broadcast %31 : vector<1x256xf32> to vector<8x256xf32>
    %33 = arith.mulf %30, %32 : vector<8x256xf32>
    %c48 = arith.constant 48 : index
    %c0_16 = arith.constant 0 : index
    %34 = vector.load %arg6[%c48, %c0_16] : memref<72x256xf32, #tpu.memory_space<vmem>>, vector<8x256xf32>
    tpu.vector_store %arg6[%c48, %c0_16], %33 {strides = array<i32>} : memref<72x256xf32, #tpu.memory_space<vmem>>, vector<8x256xf32>,
    %c240_i32 = arith.constant 240 : i32
    %35 = tpu.dynamic_rotate %0 by %c240_i32 dim 1 : vector<8x256xf32>, i32 -> vector<8x256xf32>
    %c7 = arith.constant 7 : index
    %c0_17 = arith.constant 0 : index
    %36 = vector.load %arg2[%c7, %c0_17] : memref<9x256xf32, #tpu.memory_space<vmem>>, vector<1x256xf32>
    %37 = vector.broadcast %36 : vector<1x256xf32> to vector<8x256xf32>
    %38 = arith.mulf %35, %37 : vector<8x256xf32>
    %c56 = arith.constant 56 : index
    %c0_18 = arith.constant 0 : index
    %39 = vector.load %arg6[%c56, %c0_18] : memref<72x256xf32, #tpu.memory_space<vmem>>, vector<8x256xf32>
    tpu.vector_store %arg6[%c56, %c0_18], %38 {strides = array<i32>} : memref<72x256xf32, #tpu.memory_space<vmem>>, vector<8x256xf32>,
    %c239_i32 = arith.constant 239 : i32
    %40 = tpu.dynamic_rotate %0 by %c239_i32 dim 1 : vector<8x256xf32>, i32 -> vector<8x256xf32>
    %c8_19 = arith.constant 8 : index
    %c0_20 = arith.constant 0 : index
    %41 = vector.load %arg2[%c8_19, %c0_20] : memref<9x256xf32, #tpu.memory_space<vmem>>, vector<1x256xf32>
    %42 = vector.broadcast %41 : vector<1x256xf32> to vector<8x256xf32>
    %43 = arith.mulf %40, %42 : vector<8x256xf32>
    %c64 = arith.constant 64 : index
    %c0_21 = arith.constant 0 : index
    %44 = vector.load %arg6[%c64, %c0_21] : memref<72x256xf32, #tpu.memory_space<vmem>>, vector<8x256xf32>
    tpu.vector_store %arg6[%c64, %c0_21], %43 {strides = array<i32>} : memref<72x256xf32, #tpu.memory_space<vmem>>, vector<8x256xf32>,
    %c0_22 = arith.constant 0 : index
    %c0_23 = arith.constant 0 : index
    %45 = vector.load %arg3[%c0_22, %c0_23] : memref<4x72xf32, #tpu.memory_space<vmem>>, vector<4x72xf32>
    %c0_24 = arith.constant 0 : index
    %c0_25 = arith.constant 0 : index
    %46 = vector.load %arg6[%c0_24, %c0_25] : memref<72x256xf32, #tpu.memory_space<vmem>>, vector<72x256xf32>
    %cst = arith.constant dense<0.000000e+00> : vector<4x256xf32>
    %47 = tpu.matmul %45, %46, %cst {dimension_numbers = #tpu.dot_dimension_numbers<[1], [0], [0], [1], [0, 0, 1, 1], [], []>} : vector<4x72xf32>, vector<72x256xf32>, vector<4x256xf32> -> vector<4x256xf32>
    %c0_26 = arith.constant 0 : index
    %c0_27 = arith.constant 0 : index
    %48 = vector.load %arg4[%c0_26, %c0_27] : memref<4x1xf32, #tpu.memory_space<vmem>>, vector<4x1xf32>
    %49 = vector.broadcast %48 : vector<4x1xf32> to vector<4x256xf32>
    %50 = arith.addf %47, %49 : vector<4x256xf32>
    %c0_28 = arith.constant 0 : index
    %c0_29 = arith.constant 0 : index
    %51 = vector.load %arg5[%c0_28, %c0_29] : memref<4x256xf32, #tpu.memory_space<vmem>>, vector<4x256xf32>
    tpu.vector_store %arg5[%c0_28, %c0_29], %50 {strides = array<i32>} : memref<4x256xf32, #tpu.memory_space<vmem>>, vector<4x256xf32>,
    return
  }
  func.func @transform_0(%arg0: i32) -> (i32, i32) {
    %c0_i32 = arith.constant 0 : i32
    %c0_i32_0 = arith.constant 0 : i32
    return %c0_i32, %arg0 : i32, i32
  }
  func.func @transform_1(%arg0: i32) -> (i32, i32) {
    %c0_i32 = arith.constant 0 : i32
    %c0_i32_0 = arith.constant 0 : i32
    %c0_i32_1 = arith.constant 0 : i32
    return %c0_i32, %c0_i32_0 : i32, i32
  }
  func.func @transform_2(%arg0: i32) -> (i32, i32) {
    %c0_i32 = arith.constant 0 : i32
    %c0_i32_0 = arith.constant 0 : i32
    %c0_i32_1 = arith.constant 0 : i32
    return %c0_i32, %c0_i32_0 : i32, i32
  }
  func.func @transform_3(%arg0: i32) -> (i32, i32) {
    %c0_i32 = arith.constant 0 : i32
    %c0_i32_0 = arith.constant 0 : i32
    %c0_i32_1 = arith.constant 0 : i32
    return %c0_i32, %c0_i32_0 : i32, i32
  }
  func.func @transform_4(%arg0: i32) -> (i32, i32) {
    %c0_i32 = arith.constant 0 : i32
    %c0_i32_0 = arith.constant 0 : i32
    return %c0_i32, %arg0 : i32, i32
  }
}

</mosaic_0001>

<llo_original>
// kernel: tpu_custom_call.1
$region0: #{tpu_custom_call.1}
  #allocation0 [shape = 'u32[]', space=smem, size = 0x4, offset = 0x4, fixed_abs, tag = 'smem constant byte address 0x4 - core index']
  #allocation1 [shape = 'u32[144,128]{1,0:T(1,128)}', space=vmem, size = 0x12000, scoped, tag = 'internal scratch']
  #allocation2 [shape = 'f32[72,256]{1,0:T(8,128)}', space=vmem, size = 0x12000, scoped, tag = 'scratch operand']
  %s0 = inlined_call_operand.hbm [shape: f32[8,512], index: 0, kind: input, shape index: {}]
  %s1 = inlined_call_operand.hbm [shape: f32[9,256], index: 1, kind: input, shape index: {}]
  %s2 = inlined_call_operand.vmem [shape: f32[4,72], index: 2, kind: input, shape index: {}]
  %s3 = inlined_call_operand.vmem [shape: f32[4,1], index: 3, kind: input, shape index: {}]
  %s4 = inlined_call_operand.hbm [shape: f32[4,512], index: 4, kind: output, shape index: {}]
  %s5 = sld [smem:[#allocation0]]
  $region57: #{tpu_custom_call.1} parent=0
    _
  %s7 = ssub.s32 1, %s5
  %s8 = scalar_select 0, %s7, %s5
  $region1: #{tpu_custom_call.1} parent=0
    #allocation3 [shape = 'u8[16384]{0}', space=vmem, size = 0x4000, scoped, tag = 'input window, operand 0']
    #allocation4 [shape = 's32[2]{0}', space=sflag, size = 0x8, scoped, tag = 'scoped memory for tpu_custom_call.1']
    #allocation5 [shape = 's32[2]{0}', space=sflag, size = 0x8, scoped, tag = 'scoped memory for tpu_custom_call.1']
    #allocation6 [shape = 'u8[16384]{0}', space=vmem, size = 0x4000, scoped, tag = 'input window, operand 1, single buffered']
    #allocation7 [shape = 's32[1]{0}', space=sflag, size = 0x4, scoped, tag = 'scoped memory for tpu_custom_call.1']
    #allocation8 [shape = 'u8[8192]{0}', space=vmem, size = 0x2000, scoped, tag = 'output window, operand 0']
    %9 = vsyncpa [#allocation4], 0
    %s10 = scalar_lea.sflag [#allocation4], 1
    %11 = vsyncpa %s10, 0
    %12 = vsyncpa [#allocation7], 0
    %13 = vsyncpa [#allocation5], 0
    %s14 = scalar_lea.sflag [#allocation5], 1
    %15 = vsyncpa %s14, 0
    loop: start=0, step=1, limit=4
    $region2: #{tpu_custom_call.1} parent=1 // loop_pre_header
      _
    $region3: #{tpu_custom_call.1} parent=1 // loop_header
      %s17 = sphi 0, %s21
      %p18 = scmp.ge.s32.totalorder %s17, 4
      %s27 = sphi 0, %s29
      %s30 = sphi 0, %s27
      %s31 = sphi 0, %s30
      %s47 = sphi 0, %s31
      %s51 = sphi 0, %s51
      %s53 = sphi 0, %s51
      %s54 = sphi 0, %s53
      %s68 = sphi 0, %s54
      %s72 = sphi 0, %s72
      %s74 = sphi 0, %s72
      %s75 = sphi 0, %s74
      %s89 = sphi 0, %s75
      %s93 = sphi 0, %s93
      %s95 = sphi 0, %s93
      %s96 = sphi 0, %s95
      %s110 = sphi 0, %s96
      %s116 = sphi 0, %s118
      %s119 = sphi 0, %s116
      %s120 = sphi 0, %s119
      %s136 = sphi 0, %s120
    $region4: #{tpu_custom_call.1} parent=1 // loop_header_branch
      %20 = sbr.rel (%p18) target = $region8
    $region5: #{tpu_custom_call.1} parent=1 // loop_body
      %s22 = ssub.s32 %s17, 1
      %s23 = ssub.s32 %s17, 2
      %s24 = sadd.s32 %s17, 1
      %s25 = ssub.s32 %s17, %s24
      %p26 = scmp.eq.s32.totalorder %s25, 0
      %s28 = sadd.s32 %s27, 1
      %s29 = scalar_select %p26, %s27, %s28
      %p32 = pneg %p26
      %p33 = scmp.eq.s32.totalorder %s17, 1
      %p34 = por %p32, %p33
      %p35 = scmp.ne.s32.totalorder %s27, %s30
      %p36 = scmp.eq.s32.totalorder %s17, 0
      %p37 = por %p35, %p36
      %p38 = scmp.ne.s32.totalorder %s27, %s30
      %p39 = scmp.eq.s32.totalorder %s22, 1
      %p40 = por %p38, %p39
      %p41 = scmp.ne.s32.totalorder %s30, %s31
      %p42 = scmp.eq.s32.totalorder %s22, 0
      %p43 = por %p41, %p42
      %p44 = scmp.ne.s32.totalorder %s30, %s31
      %p45 = scmp.eq.s32.totalorder %s23, 1
      %p46 = por %p44, %p45
      %p48 = scmp.ne.s32.totalorder %s31, %s47
      %p49 = scmp.eq.s32.totalorder %s23, 0
      %p50 = por %p48, %p49
      %s52 = sadd.s32 %s51, 1
      %p55 = scmp.eq.s32.totalorder %s17, 1
      %p56 = scmp.ne.s32.totalorder %s51, %s53
      %p57 = scmp.eq.s32.totalorder %s17, 0
      %p58 = por %p56, %p57
      %p59 = scmp.ne.s32.totalorder %s51, %s53
      %p60 = scmp.eq.s32.totalorder %s22, 1
      %p61 = por %p59, %p60
      %p62 = scmp.ne.s32.totalorder %s53, %s54
      %p63 = scmp.eq.s32.totalorder %s22, 0
      %p64 = por %p62, %p63
      %p65 = scmp.ne.s32.totalorder %s53, %s54
      %p66 = scmp.eq.s32.totalorder %s23, 1
      %p67 = por %p65, %p66
      %p69 = scmp.ne.s32.totalorder %s54, %s68
      %p70 = scmp.eq.s32.totalorder %s23, 0
      %p71 = por %p69, %p70
      %s73 = sadd.s32 %s72, 1
      %p76 = scmp.eq.s32.totalorder %s17, 1
      %p77 = scmp.ne.s32.totalorder %s72, %s74
      %p78 = scmp.eq.s32.totalorder %s17, 0
      %p79 = por %p77, %p78
      %p80 = scmp.ne.s32.totalorder %s72, %s74
      %p81 = scmp.eq.s32.totalorder %s22, 1
      %p82 = por %p80, %p81
      %p83 = scmp.ne.s32.totalorder %s74, %s75
      %p84 = scmp.eq.s32.totalorder %s22, 0
      %p85 = por %p83, %p84
      %p86 = scmp.ne.s32.totalorder %s74, %s75
      %p87 = scmp.eq.s32.totalorder %s23, 1
      %p88 = por %p86, %p87
      %p90 = scmp.ne.s32.totalorder %s75, %s89
      %p91 = scmp.eq.s32.totalorder %s23, 0
      %p92 = por %p90, %p91
      %s94 = sadd.s32 %s93, 1
      %p97 = scmp.eq.s32.totalorder %s17, 1
      %p98 = scmp.ne.s32.totalorder %s93, %s95
      %p99 = scmp.eq.s32.totalorder %s17, 0
      %p100 = por %p98, %p99
      %p101 = scmp.ne.s32.totalorder %s93, %s95
      %p102 = scmp.eq.s32.totalorder %s22, 1
      %p103 = por %p101, %p102
      %p104 = scmp.ne.s32.totalorder %s95, %s96
      %p105 = scmp.eq.s32.totalorder %s22, 0
      %p106 = por %p104, %p105
      %p107 = scmp.ne.s32.totalorder %s95, %s96
      %p108 = scmp.eq.s32.totalorder %s23, 1
      %p109 = por %p107, %p108
      %p111 = scmp.ne.s32.totalorder %s96, %s110
      %p112 = scmp.eq.s32.totalorder %s23, 0
      %p113 = por %p111, %p112
      %s114 = ssub.s32 %s17, %s24
      %p115 = scmp.eq.s32.totalorder %s114, 0
      %s117 = sadd.s32 %s116, 1
      %s118 = scalar_select %p115, %s116, %s117
      %p121 = pneg %p115
      %p122 = scmp.eq.s32.totalorder %s17, 1
      %p123 = por %p121, %p122
      %p124 = scmp.ne.s32.totalorder %s116, %s119
      %p125 = scmp.eq.s32.totalorder %s17, 0
      %p126 = por %p124, %p125
      %p127 = scmp.ne.s32.totalorder %s116, %s119
      %p128 = scmp.eq.s32.totalorder %s22, 1
      %p129 = por %p127, %p128
      %p130 = scmp.ne.s32.totalorder %s119, %s120
      %p131 = scmp.eq.s32.totalorder %s22, 0
      %p132 = por %p130, %p131
      %p133 = scmp.ne.s32.totalorder %s119, %s120
      %p134 = scmp.eq.s32.totalorder %s23, 1
      %p135 = por %p133, %p134
      %p137 = scmp.ne.s32.totalorder %s120, %s136
      %p138 = scmp.eq.s32.totalorder %s23, 0
      %p139 = por %p137, %p138
      %p140 = scmp.le.s32.totalorder 1, %s17
      %p141 = scmp.lt.s32.totalorder %s17, 3
      %p142 = pnand %p140, %p141
      %p143 = pneg %p142
      // Predicated region
      $region9: #{tpu_custom_call.1} parent=5 // pred_check
        _
      $region10: #{tpu_custom_call.1} parent=5 // pred_check_branch
        %145 = sbr.rel (%p142) target = $region12
      $region11: #{tpu_custom_call.1} parent=5 // pred_region
        %s146 = ssub.s32 %s17, 1
        // Predicated region
        $region13: #{tpu_custom_call.1} parent=11 // pred_check
          %p147 = pneg %p64
        $region14: #{tpu_custom_call.1} parent=11 // pred_check_branch
          %149 = sbr.rel (%p147) target = $region16
        $region15: #{tpu_custom_call.1} parent=11 // pred_region
          %s151 = ssub.s32 512, 512
          %152 = vsyncadd [#allocation7], %s151
          %s153 = sshll.u32 [#allocation6], 4
          %s154 = int_to_ptr.vmem [resolvable:$true] %s153
          %159 = dma.hbm_to_vmem [thread:$0]  %s1, 512, %s154, [#allocation7], 256, 256, 16
        $region16: #{tpu_custom_call.1} parent=11 // pred_fallthru
          _
        // Predicated region
        $region17: #{tpu_custom_call.1} parent=11 // pred_check
          %p160 = pneg %p85
        $region18: #{tpu_custom_call.1} parent=11 // pred_check_branch
          %162 = sbr.rel (%p160) target = $region20
        $region19: #{tpu_custom_call.1} parent=11 // pred_region
          _
        $region20: #{tpu_custom_call.1} parent=11 // pred_fallthru
          _
        // Predicated region
        $region21: #{tpu_custom_call.1} parent=11 // pred_check
          %p163 = pneg %p106
        $region22: #{tpu_custom_call.1} parent=11 // pred_check_branch
          %165 = sbr.rel (%p163) target = $region24
        $region23: #{tpu_custom_call.1} parent=11 // pred_region
          _
        $region24: #{tpu_custom_call.1} parent=11 // pred_fallthru
          _
      $region12: #{tpu_custom_call.1} parent=5 // pred_fallthru
        _
      %p166 = scmp.lt.s32.totalorder %s17, 2
      // Predicated region
      $region25: #{tpu_custom_call.1} parent=5 // pred_check
        %p167 = pneg %p166
      $region26: #{tpu_custom_call.1} parent=5 // pred_check_branch
        %169 = sbr.rel (%p167) target = $region28
      $region27: #{tpu_custom_call.1} parent=5 // pred_region
        // Predicated region
        $region29: #{tpu_custom_call.1} parent=27 // pred_check
          %p170 = pneg %p37
        $region30: #{tpu_custom_call.1} parent=27 // pred_check_branch
          %172 = sbr.rel (%p170) target = $region32
        $region31: #{tpu_custom_call.1} parent=27 // pred_region
          %s173 = sand.u32 %s27, 1
          %s174 = scalar_lea.sflag [#allocation4], %s173
          %s175 = sand.u32 %s27, 1
          %s176 = smul.addr %s175, 16
          %s177 = scalar_lea.vmem [#allocation3], %s176
          %s178 = smul.u32 2, %s17
          %s180 = ssub.s32 256, 256
          %181 = vsyncadd %s174, %s180
          %s182 = smul.addr %s178, 128
          %s183 = scalar_lea.hbm %s0, %s182
          %s185 = sshll.u32 %s177, 4
          %s186 = int_to_ptr.vmem [resolvable:$true] %s185
          %188 = dma.hbm_to_vmem [thread:$0]  %s183, 256, %s186, %s174
        $region32: #{tpu_custom_call.1} parent=27 // pred_fallthru
          _
      $region28: #{tpu_custom_call.1} parent=5 // pred_fallthru
        _
      %p189 = scmp.le.s32.totalorder 1, %s17
      %p190 = scmp.lt.s32.totalorder %s17, 3
      %p191 = pnand %p189, %p190
      %p192 = pneg %p191
      // Predicated region
      $region33: #{tpu_custom_call.1} parent=5 // pred_check
        _
      $region34: #{tpu_custom_call.1} parent=5 // pred_check_branch
        %194 = sbr.rel (%p191) target = $region36
      $region35: #{tpu_custom_call.1} parent=5 // pred_region
        %s195 = ssub.s32 %s17, 1
        %s196 = sand.u32 %s30, 1
        %s197 = scalar_lea.sflag [#allocation4], %s196
        %s198 = sand.u32 %s30, 1
        %s199 = smul.addr %s198, 16
        %s200 = scalar_lea.vmem [#allocation3], %s199
        // Predicated region
        $region37: #{tpu_custom_call.1} parent=35 // pred_check
          %p201 = pneg %p43
        $region38: #{tpu_custom_call.1} parent=35 // pred_check_branch
          %203 = sbr.rel (%p201) target = $region40
        $region39: #{tpu_custom_call.1} parent=35 // pred_region
          %204 = dma.done %s197, 256
        $region40: #{tpu_custom_call.1} parent=35 // pred_fallthru
          _
        // Predicated region
        $region41: #{tpu_custom_call.1} parent=35 // pred_check
          %p205 = pneg %p64
        $region42: #{tpu_custom_call.1} parent=35 // pred_check_branch
          %207 = sbr.rel (%p205) target = $region44
        $region43: #{tpu_custom_call.1} parent=35 // pred_region
          %208 = dma.done [#allocation7], 512
        $region44: #{tpu_custom_call.1} parent=35 // pred_fallthru
          _
        %s209 = sand.u32 %s30, 1
        %s210 = scalar_lea.sflag [#allocation4], %s209
        %s211 = sand.u32 %s30, 1
        %s212 = smul.addr %s211, 16
        %s213 = scalar_lea.vmem [#allocation3], %s212
        %p214 = pneg %p43
        %p215 = pneg %p40
        %p216 = pneg %p64
        %p217 = pneg %p61
        %p218 = pneg %p85
        %p219 = pneg %p82
        %p220 = pneg %p106
        %p221 = pneg %p103
        %p222 = pneg %p132
        %p223 = pneg %p129
        %s224 = sand.u32 %s119, 1
        %s225 = scalar_lea.sflag [#allocation5], %s224
        %s226 = sand.u32 %s119, 1
        %s227 = smul.addr %s226, 8
        %s228 = scalar_lea.vmem [#allocation8], %s227
        %s229 = smul.u32 2, %s22
        %s230 = smul.u32 2, %s22
        %v231 = vld [vmem:[%s200] sm:$0xff]
        %v232 = vld [vmem:[%s200 + $0x8] sm:$0xff]
        %233 = vrot.lane.b32.xlu0 %v231, 17
        %v234 = vpop.permute.xlu0 %233
        %235 = vrot.lane.b32.xlu0 %v232, 17
        %v236 = vpop.permute.xlu0 %235
        %v237 = vlaneseq
        %v238 = vand.u32 %v237, 127
        %vm239 = vcmp.lt.s32.totalorder %v238, 17
        %v240 = vsel %vm239, %v234, %v236
        %v241 = vsel %vm239, %v236, %v234
        %v242 = vld [vmem:[#allocation6] ss:$8 sm:$0x3]
        %v244 = vlaneseq
        %v245 = vshrl.u32 %v244, 7
        %v246 = vsub.s32 0, %v245
        %v247 = vrot.slane %v242, %v246
        %v248 = vlaneseq
        %v249 = vshrl.u32 %v248, 7
        %v250 = vsub.s32 1, %v249
        %v251 = vrot.slane %v242, %v250
        %v254 = vmul.f32 %v241, %v247
        %v255 = vmul.f32 %v240, %v251
        %256 = vst [vmem:[#allocation2] sm:$0xff] %v254
        %257 = vst [vmem:[#allocation2 + $0x8] sm:$0xff] %v255
        %258 = vrot.lane.b32.xlu0 %v231, 16
        %v259 = vpop.permute.xlu0 %258
        %260 = vrot.lane.b32.xlu0 %v232, 16
        %v261 = vpop.permute.xlu0 %260
        %vm262 = vcmp.lt.s32.totalorder %v238, 16
        %v263 = vsel %vm262, %v259, %v261
        %v264 = vsel %vm262, %v261, %v259
        %s265 = scalar_lea.vmem [#allocation6], 1
        %v266 = vld [vmem:[%s265] ss:$8 sm:$0x3]
        %v268 = vlaneseq
        %v269 = vshrl.u32 %v268, 7
        %v270 = vsub.s32 0, %v269
        %v271 = vrot.slane %v266, %v270
        %v272 = vlaneseq
        %v273 = vshrl.u32 %v272, 7
        %v274 = vsub.s32 1, %v273
        %v275 = vrot.slane %v266, %v274
        %v278 = vmul.f32 %v264, %v271
        %v279 = vmul.f32 %v263, %v275
        %280 = vst [vmem:[#allocation2 + $0x10] sm:$0xff] %v278
        %281 = vst [vmem:[#allocation2 + $0x18] sm:$0xff] %v279
        %282 = vrot.lane.b32.xlu0 %v231, 15
        %v283 = vpop.permute.xlu0 %282
        %284 = vrot.lane.b32.xlu0 %v232, 15
        %v285 = vpop.permute.xlu0 %284
        %vm286 = vcmp.lt.s32.totalorder %v238, 15
        %v287 = vsel %vm286, %v283, %v285
        %v288 = vsel %vm286, %v285, %v283
        %s289 = scalar_lea.vmem [#allocation6], 2
        %v290 = vld [vmem:[%s289] ss:$8 sm:$0x3]
        %v292 = vlaneseq
        %v293 = vshrl.u32 %v292, 7
        %v294 = vsub.s32 0, %v293
        %v295 = vrot.slane %v290, %v294
        %v296 = vlaneseq
        %v297 = vshrl.u32 %v296, 7
        %v298 = vsub.s32 1, %v297
        %v299 = vrot.slane %v290, %v298
        %v302 = vmul.f32 %v288, %v295
        %v303 = vmul.f32 %v287, %v299
        %304 = vst [vmem:[#allocation2 + $0x20] sm:$0xff] %v302
        %305 = vst [vmem:[#allocation2 + $0x28] sm:$0xff] %v303
        %306 = vrot.lane.b32.xlu0 %v231, 1
        %v307 = vpop.permute.xlu0 %306
        %308 = vrot.lane.b32.xlu0 %v232, 1
        %v309 = vpop.permute.xlu0 %308
        %vm310 = vcmp.lt.s32.totalorder %v238, 1
        %v311 = vsel %vm310, %v307, %v309
        %v312 = vsel %vm310, %v309, %v307
        %s313 = scalar_lea.vmem [#allocation6], 3
        %v314 = vld [vmem:[%s313] ss:$8 sm:$0x3]
        %v316 = vlaneseq
        %v317 = vshrl.u32 %v316, 7
        %v318 = vsub.s32 0, %v317
        %v319 = vrot.slane %v314, %v318
        %v320 = vlaneseq
        %v321 = vshrl.u32 %v320, 7
        %v322 = vsub.s32 1, %v321
        %v323 = vrot.slane %v314, %v322
        %v326 = vmul.f32 %v312, %v319
        %v327 = vmul.f32 %v311, %v323
        %328 = vst [vmem:[#allocation2 + $0x30] sm:$0xff] %v326
        %329 = vst [vmem:[#allocation2 + $0x38] sm:$0xff] %v327
        %s330 = scalar_lea.vmem [#allocation6], 4
        %v331 = vld [vmem:[%s330] ss:$8 sm:$0x3]
        %v333 = vlaneseq
        %v334 = vshrl.u32 %v333, 7
        %v335 = vsub.s32 0, %v334
        %v336 = vrot.slane %v331, %v335
        %v337 = vlaneseq
        %v338 = vshrl.u32 %v337, 7
        %v339 = vsub.s32 1, %v338
        %v340 = vrot.slane %v331, %v339
        %v343 = vmul.f32 %v231, %v336
        %v344 = vmul.f32 %v232, %v340
        %345 = vst [vmem:[#allocation2 + $0x40] sm:$0xff] %v343
        %346 = vst [vmem:[#allocation2 + $0x48] sm:$0xff] %v344
        %347 = vrot.lane.b32.xlu0 %v231, 127
        %v348 = vpop.permute.xlu0 %347
        %349 = vrot.lane.b32.xlu0 %v232, 127
        %v350 = vpop.permute.xlu0 %349
        %vm351 = vcmp.lt.s32.totalorder %v238, 127
        %v352 = vsel %vm351, %v348, %v350
        %v353 = vsel %vm351, %v350, %v348
        %s354 = scalar_lea.vmem [#allocation6], 5
        %v355 = vld [vmem:[%s354] ss:$8 sm:$0x3]
        %v357 = vlaneseq
        %v358 = vshrl.u32 %v357, 7
        %v359 = vsub.s32 0, %v358
        %v360 = vrot.slane %v355, %v359
        %v361 = vlaneseq
        %v362 = vshrl.u32 %v361, 7
        %v363 = vsub.s32 1, %v362
        %v364 = vrot.slane %v355, %v363
        %v367 = vmul.f32 %v352, %v360
        %v368 = vmul.f32 %v353, %v364
        %369 = vst [vmem:[#allocation2 + $0x50] sm:$0xff] %v367
        %370 = vst [vmem:[#allocation2 + $0x58] sm:$0xff] %v368
        %371 = vrot.lane.b32.xlu0 %v231, 113
        %v372 = vpop.permute.xlu0 %371
        %373 = vrot.lane.b32.xlu0 %v232, 113
        %v374 = vpop.permute.xlu0 %373
        %vm375 = vcmp.lt.s32.totalorder %v238, 113
        %v376 = vsel %vm375, %v372, %v374
        %v377 = vsel %vm375, %v374, %v372
        %s378 = scalar_lea.vmem [#allocation6], 6
        %v379 = vld [vmem:[%s378] ss:$8 sm:$0x3]
        %v381 = vlaneseq
        %v382 = vshrl.u32 %v381, 7
        %v383 = vsub.s32 0, %v382
        %v384 = vrot.slane %v379, %v383
        %v385 = vlaneseq
        %v386 = vshrl.u32 %v385, 7
        %v387 = vsub.s32 1, %v386
        %v388 = vrot.slane %v379, %v387
        %v391 = vmul.f32 %v376, %v384
        %v392 = vmul.f32 %v377, %v388
        %393 = vst [vmem:[#allocation2 + $0x60] sm:$0xff] %v391
        %394 = vst [vmem:[#allocation2 + $0x68] sm:$0xff] %v392
        %395 = vrot.lane.b32.xlu0 %v231, 112
        %v396 = vpop.permute.xlu0 %395
        %397 = vrot.lane.b32.xlu0 %v232, 112
        %v398 = vpop.permute.xlu0 %397
        %vm399 = vcmp.lt.s32.totalorder %v238, 112
        %v400 = vsel %vm399, %v396, %v398
        %v401 = vsel %vm399, %v398, %v396
        %s402 = scalar_lea.vmem [#allocation6], 7
        %v403 = vld [vmem:[%s402] ss:$8 sm:$0x3]
        %v405 = vlaneseq
        %v406 = vshrl.u32 %v405, 7
        %v407 = vsub.s32 0, %v406
        %v408 = vrot.slane %v403, %v407
        %v409 = vlaneseq
        %v410 = vshrl.u32 %v409, 7
        %v411 = vsub.s32 1, %v410
        %v412 = vrot.slane %v403, %v411
        %v415 = vmul.f32 %v400, %v408
        %v416 = vmul.f32 %v401, %v412
        %417 = vst [vmem:[#allocation2 + $0x70] sm:$0xff] %v415
        %418 = vst [vmem:[#allocation2 + $0x78] sm:$0xff] %v416
        %419 = vrot.lane.b32.xlu0 %v231, 111
        %v420 = vpop.permute.xlu0 %419
        %421 = vrot.lane.b32.xlu0 %v232, 111
        %v422 = vpop.permute.xlu0 %421
        %vm423 = vcmp.lt.s32.totalorder %v238, 111
        %v424 = vsel %vm423, %v420, %v422
        %v425 = vsel %vm423, %v422, %v420
        %s426 = scalar_lea.vmem [#allocation6], 16
        %v427 = vld [vmem:[%s426] ss:$8 sm:$0x3]
        %v429 = vlaneseq
        %v430 = vshrl.u32 %v429, 7
        %v431 = vsub.s32 0, %v430
        %v432 = vrot.slane %v427, %v431
        %v433 = vlaneseq
        %v434 = vshrl.u32 %v433, 7
        %v435 = vsub.s32 1, %v434
        %v436 = vrot.slane %v427, %v435
        %v439 = vmul.f32 %v424, %v432
        %v440 = vmul.f32 %v425, %v436
        %441 = vst [vmem:[#allocation2 + $0x80] sm:$0xff] %v439
        %442 = vst [vmem:[#allocation2 + $0x88] sm:$0xff] %v440
        %v443 = vld [vmem:[%s2] sm:$0xf]
        %v444 = vld [vmem:[#allocation2] sm:$0xff]
        %v445 = vld [vmem:[#allocation2 + $0x8] sm:$0xff]
        %v446 = vld [vmem:[#allocation2 + $0x10] sm:$0xff]
        %v447 = vld [vmem:[#allocation2 + $0x18] sm:$0xff]
        %v448 = vld [vmem:[#allocation2 + $0x20] sm:$0xff]
        %v449 = vld [vmem:[#allocation2 + $0x28] sm:$0xff]
        %v450 = vld [vmem:[#allocation2 + $0x30] sm:$0xff]
        %v451 = vld [vmem:[#allocation2 + $0x38] sm:$0xff]
        %v452 = vld [vmem:[#allocation2 + $0x40] sm:$0xff]
        %v453 = vld [vmem:[#allocation2 + $0x48] sm:$0xff]
        %v454 = vld [vmem:[#allocation2 + $0x50] sm:$0xff]
        %v455 = vld [vmem:[#allocation2 + $0x58] sm:$0xff]
        %v456 = vld [vmem:[#allocation2 + $0x60] sm:$0xff]
        %v457 = vld [vmem:[#allocation2 + $0x68] sm:$0xff]
        %v458 = vld [vmem:[#allocation2 + $0x70] sm:$0xff]
        %v459 = vld [vmem:[#allocation2 + $0x78] sm:$0xff]
        %v460 = vld [vmem:[#allocation2 + $0x80] sm:$0xff]
        %v461 = vld [vmem:[#allocation2 + $0x88] sm:$0xff]
        %v462 = vld [vmem:[%s3] sm:$0xf]
        %464 = vset.pattern.permute.xlu0 0
        %465 = vperm.xlu0 %464, %v462
        %v466 = vpop.permute.xlu0 %465
        %vm468 = vcmask 588800
        %v470 = vsel %vm468, %v443, 0
        %472 = vmatprep.subr.mxu0 %v445
        %473 = vmatpush1.msra.mxu0 %v444
        %474 = vmatprep.subr.mxu0 %v447
        %475 = vmatpush1.msra.mxu0 %v446
        %476 = vmatprep.subr.mxu0 %v449
        %477 = vmatpush1.msra.mxu0 %v448
        %478 = vmatprep.subr.mxu0 %v451
        %479 = vmatpush1.msra.mxu0 %v450
        %480 = vmatprep.subr.mxu0 %v453
        %481 = vmatpush1.msra.mxu0 %v452
        %482 = vmatprep.subr.mxu0 %v455
        %483 = vmatpush1.msra.mxu0 %v454
        %484 = vmatprep.subr.mxu0 %v457
        %485 = vmatpush1.msra.mxu0 %v456
        %486 = vmatprep.subr.mxu0 %v459
        %487 = vmatpush1.msra.mxu0 %v458
        %488 = vmatprep.subr.mxu0 %v461
        %489 = vmatpush1.msra.mxu0 %v460
        %490 = vmatprep.subr.mxu0 0.0
        %491 = vmatpush1.msra.mxu0 0.0
        %492 = vmatprep.subr.mxu0 0.0
        %493 = vmatpush1.msra.mxu0 0.0
        %494 = vmatprep.subr.mxu0 0.0
        %495 = vmatpush1.msra.mxu0 0.0
        %496 = vmatprep.subr.mxu0 0.0
        %497 = vmatpush1.msra.mxu0 0.0
        %498 = vmatprep.subr.mxu0 0.0
        %499 = vmatpush1.msra.mxu0 0.0
        %500 = vmatprep.subr.mxu0 0.0
        %501 = vmatpush1.msra.mxu0 0.0
        %502 = vmatprep.subr.mxu0 0.0
        %503 = vmatpush1.msra.mxu0 0.0
        %504 = vmatprep.subr.mxu0 0.0
        %505 = vmatpush1.msra.mxu0 0.0
        %506 = vmatprep.subr.mxu0 0.0
        %507 = vmatpush1.msra.mxu0 0.0
        %508 = vmatprep.subr.mxu0 0.0
        %509 = vmatpush1.msra.mxu0 0.0
        %510 = vmatprep.subr.mxu0 0.0
        %511 = vmatpush1.msra.mxu0 0.0
        %512 = vmatprep.subr.mxu0 0.0
        %513 = vmatpush1.msra.mxu0 0.0
        %514 = vmatprep.subr.mxu0 0.0
        %515 = vmatpush1.msra.mxu0 0.0
        %516 = vmatprep.subr.mxu0 0.0
        %517 = vmatpush1.msra.mxu0 0.0
        %518 = vmatprep.subr.mxu0 0.0
        %519 = vmatpush1.msra.mxu0 0.0
        %520 = vmatprep.subr.mxu0 0.0
        %521 = vmatpush1.msra.mxu0 0.0
        %522 = vmatprep.subr.mxu0 0.0
        %523 = vmatpush1.msra.mxu0 0.0
        %524 = vmatprep.subr.mxu0 0.0
        %525 = vmatpush1.msra.mxu0 0.0
        %526 = vmatprep.subr.mxu0 0.0
        %527 = vmatpush1.msra.mxu0 0.0
        %528 = vmatprep.subr.mxu0 0.0
        %529 = vmatpush1.msra.mxu0 0.0
        %530 = vmatprep.subr.mxu0 0.0
        %531 = vmatpush1.msra.mxu0 0.0
        %532 = vmatprep.subr.mxu0 0.0
        %533 = vmatpush1.msra.mxu0 0.0
        %534 = vmatprep.subr.mxu0 0.0
        %535 = vmatpush1.msra.mxu0 0.0
        %536 = vmatprep.mubr.f32.mxu0 0.0
        %537 = vmatmul.mubr.f32.gmra.mrb[0].mxu0 %v470
        %v538 = vpop.f32.mrb[0].mxu0
        %v539 = vadd.f32 %v466, %v538
        %v540 = vpop.f32.mrb[0].mxu0
        %v541 = vadd.f32 %v466, %v540
        %542 = vdwg.mxu0
        %v545 = vcombine.low %v539, %v541
        %547 = vst [vmem:[%s228] sm:$0xff] %v545
        %s548 = sand.u32 %s119, 1
        %s549 = scalar_lea.sflag [#allocation5], %s548
        %s550 = sand.u32 %s119, 1
        %s551 = smul.addr %s550, 8
        %s552 = scalar_lea.vmem [#allocation8], %s551
        // Predicated region
        $region45: #{tpu_custom_call.1} parent=35 // pred_check
          %p553 = pneg %p129
        $region46: #{tpu_custom_call.1} parent=35 // pred_check_branch
          %555 = sbr.rel (%p553) target = $region48
        $region47: #{tpu_custom_call.1} parent=35 // pred_region
          %s556 = smul.u32 2, %s22
          %s558 = ssub.s32 128, 128
          %559 = vsyncadd %s549, %s558
          %s560 = smul.addr %s556, 64
          %s561 = scalar_lea.hbm %s4, %s560
          %s563 = sshll.u32 %s552, 4
          %s564 = int_to_ptr.vmem [resolvable:$true] %s563
          %566 = dma.vmem_to_hbm [thread:$0]  %s564, 128, %s561, %s549
        $region48: #{tpu_custom_call.1} parent=35 // pred_fallthru
          _
      $region36: #{tpu_custom_call.1} parent=5 // pred_fallthru
        _
      %p567 = scmp.le.s32.totalorder 2, %s17
      // Predicated region
      $region49: #{tpu_custom_call.1} parent=5 // pred_check
        %p568 = pneg %p567
      $region50: #{tpu_custom_call.1} parent=5 // pred_check_branch
        %570 = sbr.rel (%p568) target = $region52
      $region51: #{tpu_custom_call.1} parent=5 // pred_region
        %s571 = ssub.s32 %s17, 2
        // Predicated region
        $region53: #{tpu_custom_call.1} parent=51 // pred_check
          %p572 = pneg %p135
        $region54: #{tpu_custom_call.1} parent=51 // pred_check_branch
          %574 = sbr.rel (%p572) target = $region56
        $region55: #{tpu_custom_call.1} parent=51 // pred_region
          %s575 = sand.u32 %s120, 1
          %s576 = scalar_lea.sflag [#allocation5], %s575
          %s577 = sand.u32 %s120, 1
          %s578 = smul.addr %s577, 8
          %s579 = scalar_lea.vmem [#allocation8], %s578
          %580 = dma.done %s576, 128
        $region56: #{tpu_custom_call.1} parent=51 // pred_fallthru
          _
      $region52: #{tpu_custom_call.1} parent=5 // pred_fallthru
        _
    $region6: #{tpu_custom_call.1} parent=1 // loop_footer
      %s21 = sadd.s32 1, %s17
    $region7: #{tpu_custom_call.1} parent=1 // loop_footer_branch
      %16 = sbr.rel target = $region3
    $region8: #{tpu_custom_call.1} parent=1 // loop_exit
      _
    %581 = vsyncpa [#allocation4], 1
    %s582 = scalar_lea.sflag [#allocation4], 1
    %583 = vsyncpa %s582, 1
    %584 = vsyncpa [#allocation7], 1
    %585 = vsyncpa [#allocation5], 1
    %s586 = scalar_lea.sflag [#allocation5], 1
    %587 = vsyncpa %s586, 1

</llo_original>
